<compile_context>
chip_gen: v5e
topology: v5e:2x2
jax: 0.10.0
libtpu: 0.0.40
codegen_flags: <defaults>
</compile_context>

<pallas_src>
import functools

import jax
import jax.numpy as jnp
import numpy as np
from jax.experimental import pallas as pl
from jax.experimental.pallas import tpu as pltpu


def _round_up(x, m):
    return ((x + m - 1) // m) * m


# ----------------------------------------------------------------------------
# Kernel
# ----------------------------------------------------------------------------
def _qnet_kernel(n_hidden, s_ref, a_ref, *refs):
    """refs = (W1_s, W1_a, b1, [W_h, b_h] * (n_hidden-1), w_last, b_last, out_ref)."""
    out_ref = refs[-1]
    w1s_ref, w1a_ref, b1_ref = refs[0], refs[1], refs[2]
    hidden = refs[3:3 + 2 * (n_hidden - 1)]
    w_last_ref = refs[3 + 2 * (n_hidden - 1)]
    b_last_ref = refs[4 + 2 * (n_hidden - 1)]

    # Fused concat: [s, a] @ W1 == s @ W1[:d_state] + a @ W1[d_state:].
    h = (jnp.dot(s_ref[...], w1s_ref[...], preferred_element_type=jnp.float32)
         + jnp.dot(a_ref[...], w1a_ref[...], preferred_element_type=jnp.float32)
         + b1_ref[...])
    h = jnp.maximum(h, 0.0)  # ReLU (hidden layers only)

    for i in range(n_hidden - 1):
        w = hidden[2 * i][...]
        b = hidden[2 * i + 1][...]
        h = jnp.dot(h, w, preferred_element_type=jnp.float32) + b
        h = jnp.maximum(h, 0.0)

    # Final (n_units -> 1) layer without an N=1 matmul: VPU elementwise multiply
    # by the broadcast weight row, XLU transpose + sublane reduce.  The result is
    # a lane-dense (1, batch_tile) row -> unmasked full-lane output stores.
    prod = h * w_last_ref[...]                      # (bt, n_units) * (1, n_units)
    q = jnp.sum(prod.T, axis=0, keepdims=True)      # (1, bt), batch on the lane axis
    out_ref[...] = (q + b_last_ref[...]).astype(out_ref.dtype)


# ----------------------------------------------------------------------------
# Wrapper
# ----------------------------------------------------------------------------
def action_value_forward(state, action, params, *, batch_tile=256):
    """Q(s, a) MLP forward with a single fused Pallas TPU kernel.

    state:  (B, d_state) f32
    action: (B, d_action) f32
    params: [(W, b)] with W: (in, out), b: (1, out); first W has
            in = d_state + d_action, last W has out = 1.
    returns (B, 1) f32
    """
    B, d_state = state.shape
    _, d_action = action.shape
    n_linear = len(params)
    assert n_linear >= 2, "need at least one hidden layer + output layer"
    n_hidden = n_linear - 1
    n_units = params[0][0].shape[1]

    # Lane-aligned batch tile; zero-pad ragged batches (sliced off at the end).
    bt = max(128, (batch_tile // 128) * 128)
    bt = min(bt, _round_up(B, 128))
    B_pad = _round_up(B, bt)
    if B_pad != B:
        state = jnp.pad(state, ((0, B_pad - B), (0, 0)))
        action = jnp.pad(action, ((0, B_pad - B), (0, 0)))

    # Split W1 at trace time so the concat fuses into the first matmul.
    W1, b1 = params[0]
    flat_params = [W1[:d_state], W1[d_state:], b1]
    for (W, b) in params[1:-1]:
        flat_params += [W, b]
    W_last, b_last = params[-1]
    flat_params += [W_last.reshape(1, n_units), b_last.reshape(1, 1)]

    def _rep(shape):  # weights/biases: full array, replicated to every grid step
        return pl.BlockSpec(shape, lambda i: (0, 0))

    in_specs = [pl.BlockSpec((bt, d_state), lambda i: (i, 0)),
                pl.BlockSpec((bt, d_action), lambda i: (i, 0))]
    in_specs += [_rep(p.shape) for p in flat_params]

    out = pl.pallas_call(
        functools.partial(_qnet_kernel, n_hidden),
        out_shape=jax.ShapeDtypeStruct((1, B_pad), jnp.float32),
        grid_spec=pltpu.PrefetchScalarGridSpec(
            num_scalar_prefetch=0,
            grid=(B_pad // bt,),
            in_specs=in_specs,
            out_specs=pl.BlockSpec((1, bt), lambda i: (0, i)),
        ),
        compiler_params=pltpu.CompilerParams(
            dimension_semantics=("parallel",),        # shards steps across TCs on v7x
            vmem_limit_bytes=32 * 1024 * 1024,        # safe on v5e/v6e/v7x
        ),
    )(state, action, *flat_params)

    return out.reshape(B_pad, 1)[:B]


# ----------------------------------------------------------------------------
# Deterministic parameter init (mirrors nn.Linear's U(-1/sqrt(fan_in), ...))
# ----------------------------------------------------------------------------
def init_params(key, d_state, d_action, n_layers, n_units):
    dims = [d_state + d_action] + [n_units] * n_layers + [1]
    params = []
    for fan_in, fan_out in zip(dims[:-1], dims[1:]):
        key, kw, kb = jax.random.split(key, 3)
        bound = 1.0 / np.sqrt(fan_in)
        W = jax.random.uniform(kw, (fan_in, fan_out), jnp.float32, -bound, bound)
        b = jax.random.uniform(kb, (1, fan_out), jnp.float32, -bound, bound)
        params.append((W, b))
    return params


def reference_forward(state, action, params):
    h = jnp.concatenate([state, action], axis=1)
    n = len(params)
    for i, (W, b) in enumerate(params):
        h = h @ W + b
        if i < n - 1:
            h = jnp.maximum(h, 0.0)
    return h


# ----------------------------------------------------------------------------
# Main
# ----------------------------------------------------------------------------
if __name__ == "__main__":
    # TODO(synk): activation is fixed to ReLU; tanh/ELU variants would swap the
    # jnp.maximum for the matching jnp/lax op inside the kernel.
    B, d_state, d_action = 512, 24, 8
    n_layers, n_units = 2, 128

    key = jax.random.PRNGKey(0)
    key, ks, ka, kp = jax.random.split(key, 4)
    state = jax.random.normal(ks, (B, d_state), jnp.float32)
    action = jax.random.normal(ka, (B, d_action), jnp.float32)
    params = init_params(kp, d_state, d_action, n_layers, n_units)

    # Main path: 2 grid steps of 256 rows each (keeps both v7x TCs busy).
    q = action_value_forward(state, action, params, batch_tile=256)
    q = jax.block_until_ready(q)
    q_ref = reference_forward(state, action, params)
    np.testing.assert_allclose(np.asarray(q), np.asarray(q_ref),
                               rtol=1e-4, atol=1e-4)
    assert q.shape == (B, 1) and q.dtype == jnp.float32

    # Ragged-batch path: exercises zero-padding + final slice.
    Br = 37
    q_r = action_value_forward(state[:Br], action[:Br], params, batch_tile=256)
    q_r = jax.block_until_ready(q_r)
    np.testing.assert_allclose(np.asarray(q_r), np.asarray(q_ref[:Br]),
                               rtol=1e-4, atol=1e-4)
    assert q_r.shape == (Br, 1)

    print("KERNEL_OK")
</pallas_src>

<mosaic_0001>
module attributes {stable_mosaic.version = 11 : i64} {
  func.func @_qnet_kernel(%arg0: i32, %arg1: memref<256x24xf32, #tpu.memory_space<vmem>>, %arg2: memref<256x8xf32, #tpu.memory_space<vmem>>, %arg3: memref<24x128xf32, #tpu.memory_space<vmem>>, %arg4: memref<8x128xf32, #tpu.memory_space<vmem>>, %arg5: memref<1x128xf32, #tpu.memory_space<vmem>>, %arg6: memref<128x128xf32, #tpu.memory_space<vmem>>, %arg7: memref<1x128xf32, #tpu.memory_space<vmem>>, %arg8: memref<1x128xf32, #tpu.memory_space<vmem>>, %arg9: memref<1x1xf32, #tpu.memory_space<vmem>>, %arg10: memref<1x256xf32, #tpu.memory_space<vmem>>) attributes {dimension_semantics = [#tpu.dimension_semantics<parallel>], iteration_bounds = array<i64: 2>, scalar_prefetch = 0 : i64, scratch_operands = 0 : i64, tpu.core_type = #tpu.core_type<tc>, window_params = [{transform_indices = @transform_0, window_bounds = array<i64: 256, 24>}, {transform_indices = @transform_1, window_bounds = array<i64: 256, 8>}, {pipeline_mode = #tpu.pipeline_mode<synchronous>, transform_indices = @transform_2, window_bounds = array<i64: 24, 128>}, {pipeline_mode = #tpu.pipeline_mode<synchronous>, transform_indices = @transform_3, window_bounds = array<i64: 8, 128>}, {pipeline_mode = #tpu.pipeline_mode<synchronous>, transform_indices = @transform_4, window_bounds = array<i64: 1, 128>}, {pipeline_mode = #tpu.pipeline_mode<synchronous>, transform_indices = @transform_5, window_bounds = array<i64: 128, 128>}, {pipeline_mode = #tpu.pipeline_mode<synchronous>, transform_indices = @transform_6, window_bounds = array<i64: 1, 128>}, {pipeline_mode = #tpu.pipeline_mode<synchronous>, transform_indices = @transform_7, window_bounds = array<i64: 1, 128>}, {pipeline_mode = #tpu.pipeline_mode<synchronous>, transform_indices = @transform_8, window_bounds = array<i64: 1, 1>}, {transform_indices = @transform_9, window_bounds = array<i64: 1, 256>}]} {
    %c0 = arith.constant 0 : index
    %c0_0 = arith.constant 0 : index
    %0 = vector.load %arg1[%c0, %c0_0] : memref<256x24xf32, #tpu.memory_space<vmem>>, vector<256x24xf32>
    %c0_1 = arith.constant 0 : index
    %c0_2 = arith.constant 0 : index
    %1 = vector.load %arg3[%c0_1, %c0_2] : memref<24x128xf32, #tpu.memory_space<vmem>>, vector<24x128xf32>
    %cst = arith.constant dense<0.000000e+00> : vector<256x128xf32>
    %2 = tpu.matmul %0, %1, %cst {dimension_numbers = #tpu.dot_dimension_numbers<[1], [0], [0], [1], [0, 0, 1, 1], [], []>} : vector<256x24xf32>, vector<24x128xf32>, vector<256x128xf32> -> vector<256x128xf32>
    %c0_3 = arith.constant 0 : index
    %c0_4 = arith.constant 0 : index
    %3 = vector.load %arg2[%c0_3, %c0_4] : memref<256x8xf32, #tpu.memory_space<vmem>>, vector<256x8xf32>
    %c0_5 = arith.constant 0 : index
    %c0_6 = arith.constant 0 : index
    %4 = vector.load %arg4[%c0_5, %c0_6] : memref<8x128xf32, #tpu.memory_space<vmem>>, vector<8x128xf32>
    %cst_7 = arith.constant dense<0.000000e+00> : vector<256x128xf32>
    %5 = tpu.matmul %3, %4, %cst_7 {dimension_numbers = #tpu.dot_dimension_numbers<[1], [0], [0], [1], [0, 0, 1, 1], [], []>} : vector<256x8xf32>, vector<8x128xf32>, vector<256x128xf32> -> vector<256x128xf32>
    %6 = arith.addf %2, %5 : vector<256x128xf32>
    %c0_8 = arith.constant 0 : index
    %c0_9 = arith.constant 0 : index
    %7 = vector.load %arg5[%c0_8, %c0_9] : memref<1x128xf32, #tpu.memory_space<vmem>>, vector<1x128xf32>
    %8 = vector.broadcast %7 : vector<1x128xf32> to vector<256x128xf32>
    %9 = arith.addf %6, %8 : vector<256x128xf32>
    %cst_10 = arith.constant 0.000000e+00 : f32
    %10 = vector.broadcast %cst_10 : f32 to vector<256x128xf32>
    %11 = arith.maximumf %9, %10 : vector<256x128xf32>
    %c0_11 = arith.constant 0 : index
    %c0_12 = arith.constant 0 : index
    %12 = vector.load %arg6[%c0_11, %c0_12] : memref<128x128xf32, #tpu.memory_space<vmem>>, vector<128x128xf32>
    %c0_13 = arith.constant 0 : index
    %c0_14 = arith.constant 0 : index
    %13 = vector.load %arg7[%c0_13, %c0_14] : memref<1x128xf32, #tpu.memory_space<vmem>>, vector<1x128xf32>
    %cst_15 = arith.constant dense<0.000000e+00> : vector<256x128xf32>
    %14 = tpu.matmul %11, %12, %cst_15 {dimension_numbers = #tpu.dot_dimension_numbers<[1], [0], [0], [1], [0, 0, 1, 1], [], []>} : vector<256x128xf32>, vector<128x128xf32>, vector<256x128xf32> -> vector<256x128xf32>
    %15 = vector.broadcast %13 : vector<1x128xf32> to vector<256x128xf32>
    %16 = arith.addf %14, %15 : vector<256x128xf32>
    %cst_16 = arith.constant 0.000000e+00 : f32
    %17 = vector.broadcast %cst_16 : f32 to vector<256x128xf32>
    %18 = arith.maximumf %16, %17 : vector<256x128xf32>
    %c0_17 = arith.constant 0 : index
    %c0_18 = arith.constant 0 : index
    %19 = vector.load %arg8[%c0_17, %c0_18] : memref<1x128xf32, #tpu.memory_space<vmem>>, vector<1x128xf32>
    %20 = vector.broadcast %19 : vector<1x128xf32> to vector<256x128xf32>
    %21 = arith.mulf %18, %20 : vector<256x128xf32>
    %22 = tpu.transpose %21, [1, 0] : vector<256x128xf32> -> vector<128x256xf32>
    %cst_19 = arith.constant dense<0.000000e+00> : vector<256xf32>
    %23 = vector.multi_reduction <add>, %22, %cst_19 [0] : vector<128x256xf32> to vector<256xf32>
    %24 = vector.shape_cast %23 : vector<256xf32> to vector<1x256xf32>
    %c0_20 = arith.constant 0 : index
    %c0_21 = arith.constant 0 : index
    %25 = vector.load %arg9[%c0_20, %c0_21] : memref<1x1xf32, #tpu.memory_space<vmem>>, vector<1x1xf32>
    %26 = vector.broadcast %25 : vector<1x1xf32> to vector<1x256xf32>
    %27 = arith.addf %24, %26 : vector<1x256xf32>
    %c0_22 = arith.constant 0 : index
    %c0_23 = arith.constant 0 : index
    %28 = vector.load %arg10[%c0_22, %c0_23] : memref<1x256xf32, #tpu.memory_space<vmem>>, vector<1x256xf32>
    tpu.vector_store %arg10[%c0_22, %c0_23], %27 {strides = array<i32>} : memref<1x256xf32, #tpu.memory_space<vmem>>, vector<1x256xf32>,
    return
  }
  func.func @transform_0(%arg0: i32) -> (i32, i32) {
    %c0_i32 = arith.constant 0 : i32
    %c0_i32_0 = arith.constant 0 : i32
    return %arg0, %c0_i32 : i32, i32
  }
  func.func @transform_1(%arg0: i32) -> (i32, i32) {
    %c0_i32 = arith.constant 0 : i32
    %c0_i32_0 = arith.constant 0 : i32
    return %arg0, %c0_i32 : i32, i32
  }
  func.func @transform_2(%arg0: i32) -> (i32, i32) {
    %c0_i32 = arith.constant 0 : i32
    %c0_i32_0 = arith.constant 0 : i32
    %c0_i32_1 = arith.constant 0 : i32
    return %c0_i32, %c0_i32_0 : i32, i32
  }
  func.func @transform_3(%arg0: i32) -> (i32, i32) {
    %c0_i32 = arith.constant 0 : i32
    %c0_i32_0 = arith.constant 0 : i32
    %c0_i32_1 = arith.constant 0 : i32
    return %c0_i32, %c0_i32_0 : i32, i32
  }
  func.func @transform_4(%arg0: i32) -> (i32, i32) {
    %c0_i32 = arith.constant 0 : i32
    %c0_i32_0 = arith.constant 0 : i32
    %c0_i32_1 = arith.constant 0 : i32
    return %c0_i32, %c0_i32_0 : i32, i32
  }
  func.func @transform_5(%arg0: i32) -> (i32, i32) {
    %c0_i32 = arith.constant 0 : i32
    %c0_i32_0 = arith.constant 0 : i32
    %c0_i32_1 = arith.constant 0 : i32
    return %c0_i32, %c0_i32_0 : i32, i32
  }
  func.func @transform_6(%arg0: i32) -> (i32, i32) {
    %c0_i32 = arith.constant 0 : i32
    %c0_i32_0 = arith.constant 0 : i32
    %c0_i32_1 = arith.constant 0 : i32
    return %c0_i32, %c0_i32_0 : i32, i32
  }
  func.func @transform_7(%arg0: i32) -> (i32, i32) {
    %c0_i32 = arith.constant 0 : i32
    %c0_i32_0 = arith.constant 0 : i32
    %c0_i32_1 = arith.constant 0 : i32
    return %c0_i32, %c0_i32_0 : i32, i32
  }
  func.func @transform_8(%arg0: i32) -> (i32, i32) {
    %c0_i32 = arith.constant 0 : i32
    %c0_i32_0 = arith.constant 0 : i32
    %c0_i32_1 = arith.constant 0 : i32
    return %c0_i32, %c0_i32_0 : i32, i32
  }
  func.func @transform_9(%arg0: i32) -> (i32, i32) {
    %c0_i32 = arith.constant 0 : i32
    %c0_i32_0 = arith.constant 0 : i32
    return %c0_i32, %arg0 : i32, i32
  }
}

</mosaic_0001>

<llo_original>
// kernel: tpu_custom_call.1
$region0: #{tpu_custom_call.1}
  #allocation0 [shape = 'u32[]', space=smem, size = 0x4, offset = 0x4, fixed_abs, tag = 'smem constant byte address 0x4 - core index']
  #allocation1 [shape = 'u32[72,128]{1,0:T(1,128)}', space=vmem, size = 0x9000, scoped, tag = 'internal scratch']
  #allocation2 [shape = 'f32[1,1]{1,0:T(1,128)S(1)}', space=vmem, size = 0x200, scoped, tag = 'scoped memory for tpu_custom_call.1']
  %s0 = inlined_call_operand.vmem [shape: f32[512,24], index: 0, kind: input, shape index: {}]
  %s1 = inlined_call_operand.vmem [shape: f32[512,8], index: 1, kind: input, shape index: {}]
  %s2 = inlined_call_operand.vmem [shape: f32[24,128], index: 2, kind: input, shape index: {}]
  %s3 = inlined_call_operand.vmem [shape: f32[8,128], index: 3, kind: input, shape index: {}]
  %s4 = inlined_call_operand.vmem [shape: f32[1,128], index: 4, kind: input, shape index: {}]
  %s5 = inlined_call_operand.vmem [shape: f32[128,128], index: 5, kind: input, shape index: {}]
  %s6 = inlined_call_operand.vmem [shape: f32[1,128], index: 6, kind: input, shape index: {}]
  %s7 = inlined_call_operand.vmem [shape: f32[1,128], index: 7, kind: input, shape index: {}]
  %s8 = inlined_call_operand.<no memory space> [shape: f32[1,1], index: 8, kind: input, shape index: {}]
  %s9 = inlined_call_operand.hbm [shape: f32[1,512], index: 9, kind: output, shape index: {}]
  %s10 = sld [smem:[#allocation0]]
  $region69: #{tpu_custom_call.1} parent=0
    _
  %s12 = ssub.s32 1, %s10
  %s13 = scalar_select 0, %s12, %s10
  %v14 = vstv %s8
  %15 = vst [vmem:[#allocation2] sm:$0x1] %v14
  $region1: #{tpu_custom_call.1} parent=0
    #allocation3 [shape = 'u8[2048]{0}', space=vmem, size = 0x800, scoped, tag = 'output window, operand 0']
    #allocation4 [shape = 's32[2]{0}', space=sflag, size = 0x8, scoped, tag = 'scoped memory for tpu_custom_call.1']
    %16 = vsyncpa [#allocation4], 0
    %s17 = scalar_lea.sflag [#allocation4], 1
    %18 = vsyncpa %s17, 0
    loop: start=0, step=1, limit=4
    $region2: #{tpu_custom_call.1} parent=1 // loop_pre_header
      _
    $region3: #{tpu_custom_call.1} parent=1 // loop_header
      %s20 = sphi 0, %s24
      %p21 = scmp.ge.s32.totalorder %s20, 4
      %s30 = sphi 0, %s32
      %s33 = sphi 0, %s30
      %s34 = sphi 0, %s33
      %s50 = sphi 0, %s34
      %s56 = sphi 0, %s58
      %s59 = sphi 0, %s56
      %s60 = sphi 0, %s59
      %s76 = sphi 0, %s60
      %s80 = sphi 0, %s80
      %s82 = sphi 0, %s80
      %s83 = sphi 0, %s82
      %s97 = sphi 0, %s83
      %s101 = sphi 0, %s101
      %s103 = sphi 0, %s101
      %s104 = sphi 0, %s103
      %s118 = sphi 0, %s104
      %s122 = sphi 0, %s122
      %s124 = sphi 0, %s122
      %s125 = sphi 0, %s124
      %s139 = sphi 0, %s125
      %s143 = sphi 0, %s143
      %s145 = sphi 0, %s143
      %s146 = sphi 0, %s145
      %s160 = sphi 0, %s146
      %s164 = sphi 0, %s164
      %s166 = sphi 0, %s164
      %s167 = sphi 0, %s166
      %s181 = sphi 0, %s167
      %s185 = sphi 0, %s185
      %s187 = sphi 0, %s185
      %s188 = sphi 0, %s187
      %s202 = sphi 0, %s188
      %s206 = sphi 0, %s206
      %s208 = sphi 0, %s206
      %s209 = sphi 0, %s208
      %s223 = sphi 0, %s209
      %s229 = sphi 0, %s231
      %s232 = sphi 0, %s229
      %s233 = sphi 0, %s232
      %s249 = sphi 0, %s233
    $region4: #{tpu_custom_call.1} parent=1 // loop_header_branch
      %23 = sbr.rel (%p21) target = $region8
    $region5: #{tpu_custom_call.1} parent=1 // loop_body
      %s25 = ssub.s32 %s20, 1
      %s26 = ssub.s32 %s20, 2
      %s27 = sadd.s32 %s20, 1
      %s28 = ssub.s32 %s20, %s27
      %p29 = scmp.eq.s32.totalorder %s28, 0
      %s31 = sadd.s32 %s30, 1
      %s32 = scalar_select %p29, %s30, %s31
      %p35 = pneg %p29
      %p36 = scmp.eq.s32.totalorder %s20, 1
      %p37 = por %p35, %p36
      %p38 = scmp.ne.s32.totalorder %s30, %s33
      %p39 = scmp.eq.s32.totalorder %s20, 0
      %p40 = por %p38, %p39
      %p41 = scmp.ne.s32.totalorder %s30, %s33
      %p42 = scmp.eq.s32.totalorder %s25, 1
      %p43 = por %p41, %p42
      %p44 = scmp.ne.s32.totalorder %s33, %s34
      %p45 = scmp.eq.s32.totalorder %s25, 0
      %p46 = por %p44, %p45
      %p47 = scmp.ne.s32.totalorder %s33, %s34
      %p48 = scmp.eq.s32.totalorder %s26, 1
      %p49 = por %p47, %p48
      %p51 = scmp.ne.s32.totalorder %s34, %s50
      %p52 = scmp.eq.s32.totalorder %s26, 0
      %p53 = por %p51, %p52
      %s54 = ssub.s32 %s20, %s27
      %p55 = scmp.eq.s32.totalorder %s54, 0
      %s57 = sadd.s32 %s56, 1
      %s58 = scalar_select %p55, %s56, %s57
      %p61 = pneg %p55
      %p62 = scmp.eq.s32.totalorder %s20, 1
      %p63 = por %p61, %p62
      %p64 = scmp.ne.s32.totalorder %s56, %s59
      %p65 = scmp.eq.s32.totalorder %s20, 0
      %p66 = por %p64, %p65
      %p67 = scmp.ne.s32.totalorder %s56, %s59
      %p68 = scmp.eq.s32.totalorder %s25, 1
      %p69 = por %p67, %p68
      %p70 = scmp.ne.s32.totalorder %s59, %s60
      %p71 = scmp.eq.s32.totalorder %s25, 0
      %p72 = por %p70, %p71
      %p73 = scmp.ne.s32.totalorder %s59, %s60
      %p74 = scmp.eq.s32.totalorder %s26, 1
      %p75 = por %p73, %p74
      %p77 = scmp.ne.s32.totalorder %s60, %s76
      %p78 = scmp.eq.s32.totalorder %s26, 0
      %p79 = por %p77, %p78
      %s81 = sadd.s32 %s80, 1
      %p84 = scmp.eq.s32.totalorder %s20, 1
      %p85 = scmp.ne.s32.totalorder %s80, %s82
      %p86 = scmp.eq.s32.totalorder %s20, 0
      %p87 = por %p85, %p86
      %p88 = scmp.ne.s32.totalorder %s80, %s82
      %p89 = scmp.eq.s32.totalorder %s25, 1
      %p90 = por %p88, %p89
      %p91 = scmp.ne.s32.totalorder %s82, %s83
      %p92 = scmp.eq.s32.totalorder %s25, 0
      %p93 = por %p91, %p92
      %p94 = scmp.ne.s32.totalorder %s82, %s83
      %p95 = scmp.eq.s32.totalorder %s26, 1
      %p96 = por %p94, %p95
      %p98 = scmp.ne.s32.totalorder %s83, %s97
      %p99 = scmp.eq.s32.totalorder %s26, 0
      %p100 = por %p98, %p99
      %s102 = sadd.s32 %s101, 1
      %p105 = scmp.eq.s32.totalorder %s20, 1
      %p106 = scmp.ne.s32.totalorder %s101, %s103
      %p107 = scmp.eq.s32.totalorder %s20, 0
      %p108 = por %p106, %p107
      %p109 = scmp.ne.s32.totalorder %s101, %s103
      %p110 = scmp.eq.s32.totalorder %s25, 1
      %p111 = por %p109, %p110
      %p112 = scmp.ne.s32.totalorder %s103, %s104
      %p113 = scmp.eq.s32.totalorder %s25, 0
      %p114 = por %p112, %p113
      %p115 = scmp.ne.s32.totalorder %s103, %s104
      %p116 = scmp.eq.s32.totalorder %s26, 1
      %p117 = por %p115, %p116
      %p119 = scmp.ne.s32.totalorder %s104, %s118
      %p120 = scmp.eq.s32.totalorder %s26, 0
      %p121 = por %p119, %p120
      %s123 = sadd.s32 %s122, 1
      %p126 = scmp.eq.s32.totalorder %s20, 1
      %p127 = scmp.ne.s32.totalorder %s122, %s124
      %p128 = scmp.eq.s32.totalorder %s20, 0
      %p129 = por %p127, %p128
      %p130 = scmp.ne.s32.totalorder %s122, %s124
      %p131 = scmp.eq.s32.totalorder %s25, 1
      %p132 = por %p130, %p131
      %p133 = scmp.ne.s32.totalorder %s124, %s125
      %p134 = scmp.eq.s32.totalorder %s25, 0
      %p135 = por %p133, %p134
      %p136 = scmp.ne.s32.totalorder %s124, %s125
      %p137 = scmp.eq.s32.totalorder %s26, 1
      %p138 = por %p136, %p137
      %p140 = scmp.ne.s32.totalorder %s125, %s139
      %p141 = scmp.eq.s32.totalorder %s26, 0
      %p142 = por %p140, %p141
      %s144 = sadd.s32 %s143, 1
      %p147 = scmp.eq.s32.totalorder %s20, 1
      %p148 = scmp.ne.s32.totalorder %s143, %s145
      %p149 = scmp.eq.s32.totalorder %s20, 0
      %p150 = por %p148, %p149
      %p151 = scmp.ne.s32.totalorder %s143, %s145
      %p152 = scmp.eq.s32.totalorder %s25, 1
      %p153 = por %p151, %p152
      %p154 = scmp.ne.s32.totalorder %s145, %s146
      %p155 = scmp.eq.s32.totalorder %s25, 0
      %p156 = por %p154, %p155
      %p157 = scmp.ne.s32.totalorder %s145, %s146
      %p158 = scmp.eq.s32.totalorder %s26, 1
      %p159 = por %p157, %p158
      %p161 = scmp.ne.s32.totalorder %s146, %s160
      %p162 = scmp.eq.s32.totalorder %s26, 0
      %p163 = por %p161, %p162
      %s165 = sadd.s32 %s164, 1
      %p168 = scmp.eq.s32.totalorder %s20, 1
      %p169 = scmp.ne.s32.totalorder %s164, %s166
      %p170 = scmp.eq.s32.totalorder %s20, 0
      %p171 = por %p169, %p170
      %p172 = scmp.ne.s32.totalorder %s164, %s166
      %p173 = scmp.eq.s32.totalorder %s25, 1
      %p174 = por %p172, %p173
      %p175 = scmp.ne.s32.totalorder %s166, %s167
      %p176 = scmp.eq.s32.totalorder %s25, 0
      %p177 = por %p175, %p176
      %p178 = scmp.ne.s32.totalorder %s166, %s167
      %p179 = scmp.eq.s32.totalorder %s26, 1
      %p180 = por %p178, %p179
      %p182 = scmp.ne.s32.totalorder %s167, %s181
      %p183 = scmp.eq.s32.totalorder %s26, 0
      %p184 = por %p182, %p183
      %s186 = sadd.s32 %s185, 1
      %p189 = scmp.eq.s32.totalorder %s20, 1
      %p190 = scmp.ne.s32.totalorder %s185, %s187
      %p191 = scmp.eq.s32.totalorder %s20, 0
      %p192 = por %p190, %p191
      %p193 = scmp.ne.s32.totalorder %s185, %s187
      %p194 = scmp.eq.s32.totalorder %s25, 1
      %p195 = por %p193, %p194
      %p196 = scmp.ne.s32.totalorder %s187, %s188
      %p197 = scmp.eq.s32.totalorder %s25, 0
      %p198 = por %p196, %p197
      %p199 = scmp.ne.s32.totalorder %s187, %s188
      %p200 = scmp.eq.s32.totalorder %s26, 1
      %p201 = por %p199, %p200
      %p203 = scmp.ne.s32.totalorder %s188, %s202
      %p204 = scmp.eq.s32.totalorder %s26, 0
      %p205 = por %p203, %p204
      %s207 = sadd.s32 %s206, 1
      %p210 = scmp.eq.s32.totalorder %s20, 1
      %p211 = scmp.ne.s32.totalorder %s206, %s208
      %p212 = scmp.eq.s32.totalorder %s20, 0
      %p213 = por %p211, %p212
      %p214 = scmp.ne.s32.totalorder %s206, %s208
      %p215 = scmp.eq.s32.totalorder %s25, 1
      %p216 = por %p214, %p215
      %p217 = scmp.ne.s32.totalorder %s208, %s209
      %p218 = scmp.eq.s32.totalorder %s25, 0
      %p219 = por %p217, %p218
      %p220 = scmp.ne.s32.totalorder %s208, %s209
      %p221 = scmp.eq.s32.totalorder %s26, 1
      %p222 = por %p220, %p221
      %p224 = scmp.ne.s32.totalorder %s209, %s223
      %p225 = scmp.eq.s32.totalorder %s26, 0
      %p226 = por %p224, %p225
      %s227 = ssub.s32 %s20, %s27
      %p228 = scmp.eq.s32.totalorder %s227, 0
      %s230 = sadd.s32 %s229, 1
      %s231 = scalar_select %p228, %s229, %s230
      %p234 = pneg %p228
      %p235 = scmp.eq.s32.totalorder %s20, 1
      %p236 = por %p234, %p235
      %p237 = scmp.ne.s32.totalorder %s229, %s232
      %p238 = scmp.eq.s32.totalorder %s20, 0
      %p239 = por %p237, %p238
      %p240 = scmp.ne.s32.totalorder %s229, %s232
      %p241 = scmp.eq.s32.totalorder %s25, 1
      %p242 = por %p240, %p241
      %p243 = scmp.ne.s32.totalorder %s232, %s233
      %p244 = scmp.eq.s32.totalorder %s25, 0
      %p245 = por %p243, %p244
      %p246 = scmp.ne.s32.totalorder %s232, %s233
      %p247 = scmp.eq.s32.totalorder %s26, 1
      %p248 = por %p246, %p247
      %p250 = scmp.ne.s32.totalorder %s233, %s249
      %p251 = scmp.eq.s32.totalorder %s26, 0
      %p252 = por %p250, %p251
      %p253 = scmp.le.s32.totalorder 1, %s20
      %p254 = scmp.lt.s32.totalorder %s20, 3
      %p255 = pnand %p253, %p254
      %p256 = pneg %p255
      // Predicated region
      $region9: #{tpu_custom_call.1} parent=5 // pred_check
        _
      $region10: #{tpu_custom_call.1} parent=5 // pred_check_branch
        %258 = sbr.rel (%p255) target = $region12
      $region11: #{tpu_custom_call.1} parent=5 // pred_region
        %s259 = ssub.s32 %s20, 1
        // Predicated region
        $region13: #{tpu_custom_call.1} parent=11 // pred_check
          %p260 = pneg %p93
        $region14: #{tpu_custom_call.1} parent=11 // pred_check_branch
          %262 = sbr.rel (%p260) target = $region16
        $region15: #{tpu_custom_call.1} parent=11 // pred_region
          _
        $region16: #{tpu_custom_call.1} parent=11 // pred_fallthru
          _
        // Predicated region
        $region17: #{tpu_custom_call.1} parent=11 // pred_check
          %p263 = pneg %p114
        $region18: #{tpu_custom_call.1} parent=11 // pred_check_branch
          %265 = sbr.rel (%p263) target = $region20
        $region19: #{tpu_custom_call.1} parent=11 // pred_region
          _
        $region20: #{tpu_custom_call.1} parent=11 // pred_fallthru
          _
        // Predicated region
        $region21: #{tpu_custom_call.1} parent=11 // pred_check
          %p266 = pneg %p135
        $region22: #{tpu_custom_call.1} parent=11 // pred_check_branch
          %268 = sbr.rel (%p266) target = $region24
        $region23: #{tpu_custom_call.1} parent=11 // pred_region
          _
        $region24: #{tpu_custom_call.1} parent=11 // pred_fallthru
          _
        // Predicated region
        $region25: #{tpu_custom_call.1} parent=11 // pred_check
          %p269 = pneg %p156
        $region26: #{tpu_custom_call.1} parent=11 // pred_check_branch
          %271 = sbr.rel (%p269) target = $region28
        $region27: #{tpu_custom_call.1} parent=11 // pred_region
          _
        $region28: #{tpu_custom_call.1} parent=11 // pred_fallthru
          _
        // Predicated region
        $region29: #{tpu_custom_call.1} parent=11 // pred_check
          %p272 = pneg %p177
        $region30: #{tpu_custom_call.1} parent=11 // pred_check_branch
          %274 = sbr.rel (%p272) target = $region32
        $region31: #{tpu_custom_call.1} parent=11 // pred_region
          _
        $region32: #{tpu_custom_call.1} parent=11 // pred_fallthru
          _
        // Predicated region
        $region33: #{tpu_custom_call.1} parent=11 // pred_check
          %p275 = pneg %p198
        $region34: #{tpu_custom_call.1} parent=11 // pred_check_branch
          %277 = sbr.rel (%p275) target = $region36
        $region35: #{tpu_custom_call.1} parent=11 // pred_region
          _
        $region36: #{tpu_custom_call.1} parent=11 // pred_fallthru
          _
        // Predicated region
        $region37: #{tpu_custom_call.1} parent=11 // pred_check
          %p278 = pneg %p219
        $region38: #{tpu_custom_call.1} parent=11 // pred_check_branch
          %280 = sbr.rel (%p278) target = $region40
        $region39: #{tpu_custom_call.1} parent=11 // pred_region
          _
        $region40: #{tpu_custom_call.1} parent=11 // pred_fallthru
          _
      $region12: #{tpu_custom_call.1} parent=5 // pred_fallthru
        _
      %p281 = scmp.lt.s32.totalorder %s20, 2
      // Predicated region
      $region41: #{tpu_custom_call.1} parent=5 // pred_check
        %p282 = pneg %p281
      $region42: #{tpu_custom_call.1} parent=5 // pred_check_branch
        %284 = sbr.rel (%p282) target = $region44
      $region43: #{tpu_custom_call.1} parent=5 // pred_region
        // Predicated region
        $region45: #{tpu_custom_call.1} parent=43 // pred_check
          %p285 = pneg %p40
        $region46: #{tpu_custom_call.1} parent=43 // pred_check_branch
          %287 = sbr.rel (%p285) target = $region48
        $region47: #{tpu_custom_call.1} parent=43 // pred_region
          %s288 = smul.u32 32, %s20
          %p289 = scmp.lt.s32.totalorder %s288, 63
          %s290 = scalar_select %p289, %s288, 63
          %s291 = smul.addr %s290, 8
          %s292 = scalar_lea.vmem %s0, %s291
          %s293 = smul.u32 32, %s20
        $region48: #{tpu_custom_call.1} parent=43 // pred_fallthru
          _
        // Predicated region
        $region49: #{tpu_custom_call.1} parent=43 // pred_check
          %p294 = pneg %p66
        $region50: #{tpu_custom_call.1} parent=43 // pred_check_branch
          %296 = sbr.rel (%p294) target = $region52
        $region51: #{tpu_custom_call.1} parent=43 // pred_region
          %s297 = smul.u32 32, %s20
          %p298 = scmp.lt.s32.totalorder %s297, 63
          %s299 = scalar_select %p298, %s297, 63
          %s300 = smul.addr %s299, 8
          %s301 = scalar_lea.vmem %s1, %s300
          %s302 = smul.u32 32, %s20
        $region52: #{tpu_custom_call.1} parent=43 // pred_fallthru
          _
      $region44: #{tpu_custom_call.1} parent=5 // pred_fallthru
        _
      %p303 = scmp.le.s32.totalorder 1, %s20
      %p304 = scmp.lt.s32.totalorder %s20, 3
      %p305 = pnand %p303, %p304
      %p306 = pneg %p305
      // Predicated region
      $region53: #{tpu_custom_call.1} parent=5 // pred_check
        _
      $region54: #{tpu_custom_call.1} parent=5 // pred_check_branch
        %308 = sbr.rel (%p305) target = $region56
      $region55: #{tpu_custom_call.1} parent=5 // pred_region
        %s309 = ssub.s32 %s20, 1
        %s310 = smul.u32 32, %s25
        %p311 = scmp.lt.s32.totalorder %s310, 63
        %s312 = scalar_select %p311, %s310, 63
        %s313 = smul.addr %s312, 8
        %s314 = scalar_lea.vmem %s0, %s313
        %p315 = pneg %p46
        %p316 = pneg %p43
        %s317 = smul.u32 32, %s25
        %p318 = scmp.lt.s32.totalorder %s317, 63
        %s319 = scalar_select %p318, %s317, 63
        %s320 = smul.addr %s319, 8
        %s321 = scalar_lea.vmem %s1, %s320
        %p322 = pneg %p72
        %p323 = pneg %p69
        %p324 = pneg %p93
        %p325 = pneg %p90
        %p326 = pneg %p114
        %p327 = pneg %p111
        %p328 = pneg %p135
        %p329 = pneg %p132
        %p330 = pneg %p156
        %p331 = pneg %p153
        %p332 = pneg %p177
        %p333 = pneg %p174
        %p334 = pneg %p198
        %p335 = pneg %p195
        %p336 = pneg %p219
        %p337 = pneg %p216
        %p338 = pneg %p245
        %p339 = pneg %p242
        %s340 = sand.u32 %s232, 1
        %s341 = scalar_lea.sflag [#allocation4], %s340
        %s342 = sand.u32 %s232, 1
        %s343 = smul.addr %s342, 2
        %s344 = scalar_lea.vmem [#allocation3], %s343
        %s345 = smul.u32 32, %s25
        %p346 = scmp.lt.s32.totalorder %s345, 63
        %s347 = scalar_select %p346, %s345, 63
        %s348 = smul.addr %s347, 8
        %s349 = scalar_lea.vmem %s0, %s348
        %s350 = smul.u32 32, %s25
        %s351 = smul.u32 32, %s25
        %p352 = scmp.lt.s32.totalorder %s351, 63
        %s353 = scalar_select %p352, %s351, 63
        %s354 = smul.addr %s353, 8
        %s355 = scalar_lea.vmem %s1, %s354
        %s356 = smul.u32 32, %s25
        %s357 = smul.u32 2, %s25
        %v358 = vld [vmem:[%s349] sm:$0xff]
        %v359 = vld [vmem:[%s349 + $0x8] sm:$0xff]
        %v360 = vld [vmem:[%s349 + $0x10] sm:$0xff]
        %v361 = vld [vmem:[%s349 + $0x18] sm:$0xff]
        %v362 = vld [vmem:[%s349 + $0x20] sm:$0xff]
        %v363 = vld [vmem:[%s349 + $0x28] sm:$0xff]
        %v364 = vld [vmem:[%s349 + $0x30] sm:$0xff]
        %v365 = vld [vmem:[%s349 + $0x38] sm:$0xff]
        %v366 = vld [vmem:[%s349 + $0x40] sm:$0xff]
        %v367 = vld [vmem:[%s349 + $0x48] sm:$0xff]
        %v368 = vld [vmem:[%s349 + $0x50] sm:$0xff]
        %v369 = vld [vmem:[%s349 + $0x58] sm:$0xff]
        %v370 = vld [vmem:[%s349 + $0x60] sm:$0xff]
        %v371 = vld [vmem:[%s349 + $0x68] sm:$0xff]
        %v372 = vld [vmem:[%s349 + $0x70] sm:$0xff]
        %v373 = vld [vmem:[%s349 + $0x78] sm:$0xff]
        %v374 = vld [vmem:[%s349 + $0x80] sm:$0xff]
        %v375 = vld [vmem:[%s349 + $0x88] sm:$0xff]
        %v376 = vld [vmem:[%s349 + $0x90] sm:$0xff]
        %v377 = vld [vmem:[%s349 + $0x98] sm:$0xff]
        %v378 = vld [vmem:[%s349 + $0xa0] sm:$0xff]
        %v379 = vld [vmem:[%s349 + $0xa8] sm:$0xff]
        %v380 = vld [vmem:[%s349 + $0xb0] sm:$0xff]
        %v381 = vld [vmem:[%s349 + $0xb8] sm:$0xff]
        %v382 = vld [vmem:[%s349 + $0xc0] sm:$0xff]
        %v383 = vld [vmem:[%s349 + $0xc8] sm:$0xff]
        %v384 = vld [vmem:[%s349 + $0xd0] sm:$0xff]
        %v385 = vld [vmem:[%s349 + $0xd8] sm:$0xff]
        %v386 = vld [vmem:[%s349 + $0xe0] sm:$0xff]
        %v387 = vld [vmem:[%s349 + $0xe8] sm:$0xff]
        %v388 = vld [vmem:[%s349 + $0xf0] sm:$0xff]
        %v389 = vld [vmem:[%s349 + $0xf8] sm:$0xff]
        %v390 = vld [vmem:[%s2] sm:$0xff]
        %v391 = vld [vmem:[%s2 + $0x8] sm:$0xff]
        %v392 = vld [vmem:[%s2 + $0x10] sm:$0xff]
        %v393 = vld [vmem:[%s355] sm:$0xff]
        %v394 = vld [vmem:[%s355 + $0x8] sm:$0xff]
        %v395 = vld [vmem:[%s355 + $0x10] sm:$0xff]
        %v396 = vld [vmem:[%s355 + $0x18] sm:$0xff]
        %v397 = vld [vmem:[%s355 + $0x20] sm:$0xff]
        %v398 = vld [vmem:[%s355 + $0x28] sm:$0xff]
        %v399 = vld [vmem:[%s355 + $0x30] sm:$0xff]
        %v400 = vld [vmem:[%s355 + $0x38] sm:$0xff]
        %v401 = vld [vmem:[%s355 + $0x40] sm:$0xff]
        %v402 = vld [vmem:[%s355 + $0x48] sm:$0xff]
        %v403 = vld [vmem:[%s355 + $0x50] sm:$0xff]
        %v404 = vld [vmem:[%s355 + $0x58] sm:$0xff]
        %v405 = vld [vmem:[%s355 + $0x60] sm:$0xff]
        %v406 = vld [vmem:[%s355 + $0x68] sm:$0xff]
        %v407 = vld [vmem:[%s355 + $0x70] sm:$0xff]
        %v408 = vld [vmem:[%s355 + $0x78] sm:$0xff]
        %v409 = vld [vmem:[%s355 + $0x80] sm:$0xff]
        %v410 = vld [vmem:[%s355 + $0x88] sm:$0xff]
        %v411 = vld [vmem:[%s355 + $0x90] sm:$0xff]
        %v412 = vld [vmem:[%s355 + $0x98] sm:$0xff]
        %v413 = vld [vmem:[%s355 + $0xa0] sm:$0xff]
        %v414 = vld [vmem:[%s355 + $0xa8] sm:$0xff]
        %v415 = vld [vmem:[%s355 + $0xb0] sm:$0xff]
        %v416 = vld [vmem:[%s355 + $0xb8] sm:$0xff]
        %v417 = vld [vmem:[%s355 + $0xc0] sm:$0xff]
        %v418 = vld [vmem:[%s355 + $0xc8] sm:$0xff]
        %v419 = vld [vmem:[%s355 + $0xd0] sm:$0xff]
        %v420 = vld [vmem:[%s355 + $0xd8] sm:$0xff]
        %v421 = vld [vmem:[%s355 + $0xe0] sm:$0xff]
        %v422 = vld [vmem:[%s355 + $0xe8] sm:$0xff]
        %v423 = vld [vmem:[%s355 + $0xf0] sm:$0xff]
        %v424 = vld [vmem:[%s355 + $0xf8] sm:$0xff]
        %v425 = vld [vmem:[%s3] sm:$0xff]
        %vm426 = vcmask 64512
        %v428 = vsel %vm426, %v393, 0
        %v431 = vsel %vm426, %v394, 0
        %v434 = vsel %vm426, %v395, 0
        %v437 = vsel %vm426, %v396, 0
        %v440 = vsel %vm426, %v397, 0
        %v443 = vsel %vm426, %v398, 0
        %v446 = vsel %vm426, %v399, 0
        %v449 = vsel %vm426, %v400, 0
        %v452 = vsel %vm426, %v401, 0
        %v455 = vsel %vm426, %v402, 0
        %v458 = vsel %vm426, %v403, 0
        %v461 = vsel %vm426, %v404, 0
        %v464 = vsel %vm426, %v405, 0
        %v467 = vsel %vm426, %v406, 0
        %v470 = vsel %vm426, %v407, 0
        %v473 = vsel %vm426, %v408, 0
        %v476 = vsel %vm426, %v409, 0
        %v479 = vsel %vm426, %v410, 0
        %v482 = vsel %vm426, %v411, 0
        %v485 = vsel %vm426, %v412, 0
        %v488 = vsel %vm426, %v413, 0
        %v491 = vsel %vm426, %v414, 0
        %v494 = vsel %vm426, %v415, 0
        %v497 = vsel %vm426, %v416, 0
        %v500 = vsel %vm426, %v417, 0
        %v503 = vsel %vm426, %v418, 0
        %v506 = vsel %vm426, %v419, 0
        %v509 = vsel %vm426, %v420, 0
        %v512 = vsel %vm426, %v421, 0
        %v515 = vsel %vm426, %v422, 0
        %v518 = vsel %vm426, %v423, 0
        %v521 = vsel %vm426, %v424, 0
        %523 = vmatpush.msra.mxu0 0.0
        %524 = vmatpush.msra.mxu0 0.0
        %525 = vmatpush.msra.mxu0 0.0
        %526 = vmatpush.msra.mxu0 0.0
        %527 = vmatpush.msra.mxu0 0.0
        %528 = vmatpush.msra.mxu0 0.0
        %529 = vmatpush.msra.mxu0 0.0
        %530 = vmatpush.msra.mxu0 0.0
        %531 = vmatpush.msra.mxu0 0.0
        %532 = vmatpush.msra.mxu0 0.0
        %533 = vmatpush.msra.mxu0 0.0
        %534 = vmatpush.msra.mxu0 0.0
        %535 = vmatpush.msra.mxu0 0.0
        %536 = vmatpush.msra.mxu0 0.0
        %537 = vmatpush.msra.mxu0 0.0
        %538 = vmatpush.msra.mxu0 %v425
        %539 = vmatmul.f32.gmra.mxu0 %v428
        %v540 = vpop.f32.mrf.mxu0
        %v541 = vadd.f32 0.0, %v540
        %542 = vmatmul.f32.gmra.mxu0 %v431
        %v543 = vpop.f32.mrf.mxu0
        %v544 = vadd.f32 0.0, %v543
        %545 = vmatmul.f32.gmra.mxu0 %v434
        %v546 = vpop.f32.mrf.mxu0
        %v547 = vadd.f32 0.0, %v546
        %548 = vmatmul.f32.gmra.mxu0 %v437
        %v549 = vpop.f32.mrf.mxu0
        %v550 = vadd.f32 0.0, %v549
        %551 = vmatmul.f32.gmra.mxu0 %v440
        %v552 = vpop.f32.mrf.mxu0
        %v553 = vadd.f32 0.0, %v552
        %554 = vmatmul.f32.gmra.mxu0 %v443
        %v555 = vpop.f32.mrf.mxu0
        %v556 = vadd.f32 0.0, %v555
        %557 = vmatmul.f32.gmra.mxu0 %v446
        %v558 = vpop.f32.mrf.mxu0
        %v559 = vadd.f32 0.0, %v558
        %560 = vmatmul.f32.gmra.mxu0 %v449
        %v561 = vpop.f32.mrf.mxu0
        %v562 = vadd.f32 0.0, %v561
        %563 = vmatmul.f32.gmra.mxu0 %v452
        %v564 = vpop.f32.mrf.mxu0
        %v565 = vadd.f32 0.0, %v564
        %566 = vmatmul.f32.gmra.mxu0 %v455
        %v567 = vpop.f32.mrf.mxu0
        %v568 = vadd.f32 0.0, %v567
        %569 = vmatmul.f32.gmra.mxu0 %v458
        %v570 = vpop.f32.mrf.mxu0
        %v571 = vadd.f32 0.0, %v570
        %572 = vmatmul.f32.gmra.mxu0 %v461
        %v573 = vpop.f32.mrf.mxu0
        %v574 = vadd.f32 0.0, %v573
        %575 = vmatmul.f32.gmra.mxu0 %v464
        %v576 = vpop.f32.mrf.mxu0
        %v577 = vadd.f32 0.0, %v576
        %578 = vmatmul.f32.gmra.mxu0 %v467
        %v579 = vpop.f32.mrf.mxu0
        %v580 = vadd.f32 0.0, %v579
        %581 = vmatmul.f32.gmra.mxu0 %v470
        %v582 = vpop.f32.mrf.mxu0
        %v583 = vadd.f32 0.0, %v582
        %584 = vmatmul.f32.gmra.mxu0 %v473
        %v585 = vpop.f32.mrf.mxu0
        %v586 = vadd.f32 0.0, %v585
        %587 = vmatmul.f32.gmra.mxu0 %v476
        %v588 = vpop.f32.mrf.mxu0
        %v589 = vadd.f32 0.0, %v588
        %590 = vmatmul.f32.gmra.mxu0 %v479
        %v591 = vpop.f32.mrf.mxu0
        %v592 = vadd.f32 0.0, %v591
        %593 = vmatmul.f32.gmra.mxu0 %v482
        %v594 = vpop.f32.mrf.mxu0
        %v595 = vadd.f32 0.0, %v594
        %596 = vmatmul.f32.gmra.mxu0 %v485
        %v597 = vpop.f32.mrf.mxu0
        %v598 = vadd.f32 0.0, %v597
        %599 = vmatmul.f32.gmra.mxu0 %v488
        %v600 = vpop.f32.mrf.mxu0
        %v601 = vadd.f32 0.0, %v600
        %602 = vmatmul.f32.gmra.mxu0 %v491
        %v603 = vpop.f32.mrf.mxu0
        %v604 = vadd.f32 0.0, %v603
        %605 = vmatmul.f32.gmra.mxu0 %v494
        %v606 = vpop.f32.mrf.mxu0
        %v607 = vadd.f32 0.0, %v606
        %608 = vmatmul.f32.gmra.mxu0 %v497
        %v609 = vpop.f32.mrf.mxu0
        %v610 = vadd.f32 0.0, %v609
        %611 = vmatmul.f32.gmra.mxu0 %v500
        %v612 = vpop.f32.mrf.mxu0
        %v613 = vadd.f32 0.0, %v612
        %614 = vmatmul.f32.gmra.mxu0 %v503
        %v615 = vpop.f32.mrf.mxu0
        %v616 = vadd.f32 0.0, %v615
        %617 = vmatmul.f32.gmra.mxu0 %v506
        %v618 = vpop.f32.mrf.mxu0
        %v619 = vadd.f32 0.0, %v618
        %620 = vmatmul.f32.gmra.mxu0 %v509
        %v621 = vpop.f32.mrf.mxu0
        %v622 = vadd.f32 0.0, %v621
        %623 = vmatmul.f32.gmra.mxu0 %v512
        %v624 = vpop.f32.mrf.mxu0
        %v625 = vadd.f32 0.0, %v624
        %626 = vmatmul.f32.gmra.mxu0 %v515
        %v627 = vpop.f32.mrf.mxu0
        %v628 = vadd.f32 0.0, %v627
        %629 = vmatmul.f32.gmra.mxu0 %v518
        %v630 = vpop.f32.mrf.mxu0
        %v631 = vadd.f32 0.0, %v630
        %632 = vmatmul.f32.gmra.mxu0 %v521
        %v633 = vpop.f32.mrf.mxu0
        %v634 = vadd.f32 0.0, %v633
        %635 = vdwg.mxu0
        %vm636 = vcmask 195584
        %v638 = vsel %vm636, %v358, 0
        %v641 = vsel %vm636, %v359, 0
        %v644 = vsel %vm636, %v360, 0
        %v647 = vsel %vm636, %v361, 0
        %v650 = vsel %vm636, %v362, 0
        %v653 = vsel %vm636, %v363, 0
        %v656 = vsel %vm636, %v364, 0
        %v659 = vsel %vm636, %v365, 0
        %v662 = vsel %vm636, %v366, 0
        %v665 = vsel %vm636, %v367, 0
        %v668 = vsel %vm636, %v368, 0
        %v671 = vsel %vm636, %v369, 0
        %v674 = vsel %vm636, %v370, 0
        %v677 = vsel %vm636, %v371, 0
        %v680 = vsel %vm636, %v372, 0
        %v683 = vsel %vm636, %v373, 0
        %v686 = vsel %vm636, %v374, 0
        %v689 = vsel %vm636, %v375, 0
        %v692 = vsel %vm636, %v376, 0
        %v695 = vsel %vm636, %v377, 0
        %v698 = vsel %vm636, %v378, 0
        %v701 = vsel %vm636, %v379, 0
        %v704 = vsel %vm636, %v380, 0
        %v707 = vsel %vm636, %v381, 0
        %v710 = vsel %vm636, %v382, 0
        %v713 = vsel %vm636, %v383, 0
        %v716 = vsel %vm636, %v384, 0
        %v719 = vsel %vm636, %v385, 0
        %v722 = vsel %vm636, %v386, 0
        %v725 = vsel %vm636, %v387, 0
        %v728 = vsel %vm636, %v388, 0
        %v731 = vsel %vm636, %v389, 0
        %733 = vmatpush.msra.mxu0 0.0
        %734 = vmatpush.msra.mxu0 0.0
        %735 = vmatpush.msra.mxu0 0.0
        %736 = vmatpush.msra.mxu0 0.0
        %737 = vmatpush.msra.mxu0 0.0
        %738 = vmatpush.msra.mxu0 0.0
        %739 = vmatpush.msra.mxu0 0.0
        %740 = vmatpush.msra.mxu0 0.0
        %741 = vmatpush.msra.mxu0 0.0
        %742 = vmatpush.msra.mxu0 0.0
        %743 = vmatpush.msra.mxu0 0.0
        %744 = vmatpush.msra.mxu0 0.0
        %745 = vmatpush.msra.mxu0 0.0
        %746 = vmatpush.msra.mxu0 %v392
        %747 = vmatpush.msra.mxu0 %v391
        %748 = vmatpush.msra.mxu0 %v390
        %749 = vmatmul.f32.gmra.mxu0 %v638
        %v750 = vpop.f32.mrf.mxu0
        %v751 = vadd.f32 %v541, %v750
        %752 = vmatmul.f32.gmra.mxu0 %v641
        %v753 = vpop.f32.mrf.mxu0
        %v754 = vadd.f32 %v544, %v753
        %755 = vmatmul.f32.gmra.mxu0 %v644
        %v756 = vpop.f32.mrf.mxu0
        %v757 = vadd.f32 %v547, %v756
        %758 = vmatmul.f32.gmra.mxu0 %v647
        %v759 = vpop.f32.mrf.mxu0
        %v760 = vadd.f32 %v550, %v759
        %761 = vmatmul.f32.gmra.mxu0 %v650
        %v762 = vpop.f32.mrf.mxu0
        %v763 = vadd.f32 %v553, %v762
        %764 = vmatmul.f32.gmra.mxu0 %v653
        %v765 = vpop.f32.mrf.mxu0
        %v766 = vadd.f32 %v556, %v765
        %767 = vmatmul.f32.gmra.mxu0 %v656
        %v768 = vpop.f32.mrf.mxu0
        %v769 = vadd.f32 %v559, %v768
        %770 = vmatmul.f32.gmra.mxu0 %v659
        %v771 = vpop.f32.mrf.mxu0
        %v772 = vadd.f32 %v562, %v771
        %773 = vmatmul.f32.gmra.mxu0 %v662
        %v774 = vpop.f32.mrf.mxu0
        %v775 = vadd.f32 %v565, %v774
        %776 = vmatmul.f32.gmra.mxu0 %v665
        %v777 = vpop.f32.mrf.mxu0
        %v778 = vadd.f32 %v568, %v777
        %779 = vmatmul.f32.gmra.mxu0 %v668
        %v780 = vpop.f32.mrf.mxu0
        %v781 = vadd.f32 %v571, %v780
        %782 = vmatmul.f32.gmra.mxu0 %v671
        %v783 = vpop.f32.mrf.mxu0
        %v784 = vadd.f32 %v574, %v783
        %785 = vmatmul.f32.gmra.mxu0 %v674
        %v786 = vpop.f32.mrf.mxu0
        %v787 = vadd.f32 %v577, %v786
        %788 = vmatmul.f32.gmra.mxu0 %v677
        %v789 = vpop.f32.mrf.mxu0
        %v790 = vadd.f32 %v580, %v789
        %791 = vmatmul.f32.gmra.mxu0 %v680
        %v792 = vpop.f32.mrf.mxu0
        %v793 = vadd.f32 %v583, %v792
        %794 = vmatmul.f32.gmra.mxu0 %v683
        %v795 = vpop.f32.mrf.mxu0
        %v796 = vadd.f32 %v586, %v795
        %797 = vmatmul.f32.gmra.mxu0 %v686
        %v798 = vpop.f32.mrf.mxu0
        %v799 = vadd.f32 %v589, %v798
        %800 = vmatmul.f32.gmra.mxu0 %v689
        %v801 = vpop.f32.mrf.mxu0
        %v802 = vadd.f32 %v592, %v801
        %803 = vmatmul.f32.gmra.mxu0 %v692
        %v804 = vpop.f32.mrf.mxu0
        %v805 = vadd.f32 %v595, %v804
        %806 = vmatmul.f32.gmra.mxu0 %v695
        %v807 = vpop.f32.mrf.mxu0
        %v808 = vadd.f32 %v598, %v807
        %809 = vmatmul.f32.gmra.mxu0 %v698
        %v810 = vpop.f32.mrf.mxu0
        %v811 = vadd.f32 %v601, %v810
        %812 = vmatmul.f32.gmra.mxu0 %v701
        %v813 = vpop.f32.mrf.mxu0
        %v814 = vadd.f32 %v604, %v813
        %815 = vmatmul.f32.gmra.mxu0 %v704
        %v816 = vpop.f32.mrf.mxu0
        %v817 = vadd.f32 %v607, %v816
        %818 = vmatmul.f32.gmra.mxu0 %v707
        %v819 = vpop.f32.mrf.mxu0
        %v820 = vadd.f32 %v610, %v819
        %821 = vmatmul.f32.gmra.mxu0 %v710
        %v822 = vpop.f32.mrf.mxu0
        %v823 = vadd.f32 %v613, %v822
        %824 = vmatmul.f32.gmra.mxu0 %v713
        %v825 = vpop.f32.mrf.mxu0
        %v826 = vadd.f32 %v616, %v825
        %827 = vmatmul.f32.gmra.mxu0 %v716
        %v828 = vpop.f32.mrf.mxu0
        %v829 = vadd.f32 %v619, %v828
        %830 = vmatmul.f32.gmra.mxu0 %v719
        %v831 = vpop.f32.mrf.mxu0
        %v832 = vadd.f32 %v622, %v831
        %833 = vmatmul.f32.gmra.mxu0 %v722
        %v834 = vpop.f32.mrf.mxu0
        %v835 = vadd.f32 %v625, %v834
        %836 = vmatmul.f32.gmra.mxu0 %v725
        %v837 = vpop.f32.mrf.mxu0
        %v838 = vadd.f32 %v628, %v837
        %839 = vmatmul.f32.gmra.mxu0 %v728
        %v840 = vpop.f32.mrf.mxu0
        %v841 = vadd.f32 %v631, %v840
        %842 = vmatmul.f32.gmra.mxu0 %v731
        %v843 = vpop.f32.mrf.mxu0
        %v844 = vadd.f32 %v634, %v843
        %845 = vdwg.mxu0
        %v846 = vld [vmem:[%s4] sm:$0x1]
        %v848 = vperm.slane %v846, 0
        %v850 = vadd.f32 %v751, %v848
        %v851 = vadd.f32 %v754, %v848
        %v852 = vadd.f32 %v757, %v848
        %v853 = vadd.f32 %v760, %v848
        %v854 = vadd.f32 %v763, %v848
        %v855 = vadd.f32 %v766, %v848
        %v856 = vadd.f32 %v769, %v848
        %v857 = vadd.f32 %v772, %v848
        %v858 = vadd.f32 %v775, %v848
        %v859 = vadd.f32 %v778, %v848
        %v860 = vadd.f32 %v781, %v848
        %v861 = vadd.f32 %v784, %v848
        %v862 = vadd.f32 %v787, %v848
        %v863 = vadd.f32 %v790, %v848
        %v864 = vadd.f32 %v793, %v848
        %v865 = vadd.f32 %v796, %v848
        %v866 = vadd.f32 %v799, %v848
        %v867 = vadd.f32 %v802, %v848
        %v868 = vadd.f32 %v805, %v848
        %v869 = vadd.f32 %v808, %v848
        %v870 = vadd.f32 %v811, %v848
        %v871 = vadd.f32 %v814, %v848
        %v872 = vadd.f32 %v817, %v848
        %v873 = vadd.f32 %v820, %v848
        %v874 = vadd.f32 %v823, %v848
        %v875 = vadd.f32 %v826, %v848
        %v876 = vadd.f32 %v829, %v848
        %v877 = vadd.f32 %v832, %v848
        %v878 = vadd.f32 %v835, %v848
        %v879 = vadd.f32 %v838, %v848
        %v880 = vadd.f32 %v841, %v848
        %v881 = vadd.f32 %v844, %v848
        %v882 = vmax.f32 %v850, 0.0
        %v883 = vmax.f32 %v851, 0.0
        %v884 = vmax.f32 %v852, 0.0
        %v885 = vmax.f32 %v853, 0.0
        %v886 = vmax.f32 %v854, 0.0
        %v887 = vmax.f32 %v855, 0.0
        %v888 = vmax.f32 %v856, 0.0
        %v889 = vmax.f32 %v857, 0.0
        %v890 = vmax.f32 %v858, 0.0
        %v891 = vmax.f32 %v859, 0.0
        %v892 = vmax.f32 %v860, 0.0
        %v893 = vmax.f32 %v861, 0.0
        %v894 = vmax.f32 %v862, 0.0
        %v895 = vmax.f32 %v863, 0.0
        %v896 = vmax.f32 %v864, 0.0
        %v897 = vmax.f32 %v865, 0.0
        %v898 = vmax.f32 %v866, 0.0
        %v899 = vmax.f32 %v867, 0.0
        %v900 = vmax.f32 %v868, 0.0
        %v901 = vmax.f32 %v869, 0.0
        %v902 = vmax.f32 %v870, 0.0
        %v903 = vmax.f32 %v871, 0.0
        %v904 = vmax.f32 %v872, 0.0
        %v905 = vmax.f32 %v873, 0.0
        %v906 = vmax.f32 %v874, 0.0
        %v907 = vmax.f32 %v875, 0.0
        %v908 = vmax.f32 %v876, 0.0
        %v909 = vmax.f32 %v877, 0.0
        %v910 = vmax.f32 %v878, 0.0
        %v911 = vmax.f32 %v879, 0.0
        %v912 = vmax.f32 %v880, 0.0
        %v913 = vmax.f32 %v881, 0.0
        %v914 = vld [vmem:[%s5] sm:$0xff]
        %v915 = vld [vmem:[%s5 + $0x8] sm:$0xff]
        %v916 = vld [vmem:[%s5 + $0x10] sm:$0xff]
        %v917 = vld [vmem:[%s5 + $0x18] sm:$0xff]
        %v918 = vld [vmem:[%s5 + $0x20] sm:$0xff]
        %v919 = vld [vmem:[%s5 + $0x28] sm:$0xff]
        %v920 = vld [vmem:[%s5 + $0x30] sm:$0xff]
        %v921 = vld [vmem:[%s5 + $0x38] sm:$0xff]
        %v922 = vld [vmem:[%s5 + $0x40] sm:$0xff]
        %v923 = vld [vmem:[%s5 + $0x48] sm:$0xff]
        %v924 = vld [vmem:[%s5 + $0x50] sm:$0xff]
        %v925 = vld [vmem:[%s5 + $0x58] sm:$0xff]
        %v926 = vld [vmem:[%s5 + $0x60] sm:$0xff]
        %v927 = vld [vmem:[%s5 + $0x68] sm:$0xff]
        %v928 = vld [vmem:[%s5 + $0x70] sm:$0xff]
        %v929 = vld [vmem:[%s5 + $0x78] sm:$0xff]
        %v930 = vld [vmem:[%s6] sm:$0x1]
        %v932 = vperm.slane %v930, 0
        %934 = vmatpush.msra.mxu0 %v929
        %935 = vmatpush.msra.mxu0 %v928
        %936 = vmatpush.msra.mxu0 %v927
        %937 = vmatpush.msra.mxu0 %v926
        %938 = vmatpush.msra.mxu0 %v925
        %939 = vmatpush.msra.mxu0 %v924
        %940 = vmatpush.msra.mxu0 %v923
        %941 = vmatpush.msra.mxu0 %v922
        %942 = vmatpush.msra.mxu0 %v921
        %943 = vmatpush.msra.mxu0 %v920
        %944 = vmatpush.msra.mxu0 %v919
        %945 = vmatpush.msra.mxu0 %v918
        %946 = vmatpush.msra.mxu0 %v917
        %947 = vmatpush.msra.mxu0 %v916
        %948 = vmatpush.msra.mxu0 %v915
        %949 = vmatpush.msra.mxu0 %v914
        %950 = vmatmul.f32.gmra.mxu0 %v882
        %v951 = vpop.f32.mrf.mxu0
        %v952 = vadd.f32 %v932, %v951
        %953 = vmatmul.f32.gmra.mxu0 %v883
        %v954 = vpop.f32.mrf.mxu0
        %v955 = vadd.f32 %v932, %v954
        %956 = vmatmul.f32.gmra.mxu0 %v884
        %v957 = vpop.f32.mrf.mxu0
        %v958 = vadd.f32 %v932, %v957
        %959 = vmatmul.f32.gmra.mxu0 %v885
        %v960 = vpop.f32.mrf.mxu0
        %v961 = vadd.f32 %v932, %v960
        %962 = vmatmul.f32.gmra.mxu0 %v886
        %v963 = vpop.f32.mrf.mxu0
        %v964 = vadd.f32 %v932, %v963
        %965 = vmatmul.f32.gmra.mxu0 %v887
        %v966 = vpop.f32.mrf.mxu0
        %v967 = vadd.f32 %v932, %v966
        %968 = vmatmul.f32.gmra.mxu0 %v888
        %v969 = vpop.f32.mrf.mxu0
        %v970 = vadd.f32 %v932, %v969
        %971 = vmatmul.f32.gmra.mxu0 %v889
        %v972 = vpop.f32.mrf.mxu0
        %v973 = vadd.f32 %v932, %v972
        %974 = vmatmul.f32.gmra.mxu0 %v890
        %v975 = vpop.f32.mrf.mxu0
        %v976 = vadd.f32 %v932, %v975
        %977 = vmatmul.f32.gmra.mxu0 %v891
        %v978 = vpop.f32.mrf.mxu0
        %v979 = vadd.f32 %v932, %v978
        %980 = vmatmul.f32.gmra.mxu0 %v892
        %v981 = vpop.f32.mrf.mxu0
        %v982 = vadd.f32 %v932, %v981
        %983 = vmatmul.f32.gmra.mxu0 %v893
        %v984 = vpop.f32.mrf.mxu0
        %v985 = vadd.f32 %v932, %v984
        %986 = vmatmul.f32.gmra.mxu0 %v894
        %v987 = vpop.f32.mrf.mxu0
        %v988 = vadd.f32 %v932, %v987
        %989 = vmatmul.f32.gmra.mxu0 %v895
        %v990 = vpop.f32.mrf.mxu0
        %v991 = vadd.f32 %v932, %v990
        %992 = vmatmul.f32.gmra.mxu0 %v896
        %v993 = vpop.f32.mrf.mxu0
        %v994 = vadd.f32 %v932, %v993
        %995 = vmatmul.f32.gmra.mxu0 %v897
        %v996 = vpop.f32.mrf.mxu0
        %v997 = vadd.f32 %v932, %v996
        %998 = vmatmul.f32.gmra.mxu0 %v898
        %v999 = vpop.f32.mrf.mxu0
        %v1000 = vadd.f32 %v932, %v999
        %1001 = vmatmul.f32.gmra.mxu0 %v899
        %v1002 = vpop.f32.mrf.mxu0
        %v1003 = vadd.f32 %v932, %v1002
        %1004 = vmatmul.f32.gmra.mxu0 %v900
        %v1005 = vpop.f32.mrf.mxu0
        %v1006 = vadd.f32 %v932, %v1005
        %1007 = vmatmul.f32.gmra.mxu0 %v901
        %v1008 = vpop.f32.mrf.mxu0
        %v1009 = vadd.f32 %v932, %v1008
        %1010 = vmatmul.f32.gmra.mxu0 %v902
        %v1011 = vpop.f32.mrf.mxu0
        %v1012 = vadd.f32 %v932, %v1011
        %1013 = vmatmul.f32.gmra.mxu0 %v903
        %v1014 = vpop.f32.mrf.mxu0
        %v1015 = vadd.f32 %v932, %v1014
        %1016 = vmatmul.f32.gmra.mxu0 %v904
        %v1017 = vpop.f32.mrf.mxu0
        %v1018 = vadd.f32 %v932, %v1017
        %1019 = vmatmul.f32.gmra.mxu0 %v905
        %v1020 = vpop.f32.mrf.mxu0
        %v1021 = vadd.f32 %v932, %v1020
        %1022 = vmatmul.f32.gmra.mxu0 %v906
        %v1023 = vpop.f32.mrf.mxu0
        %v1024 = vadd.f32 %v932, %v1023
        %1025 = vmatmul.f32.gmra.mxu0 %v907
        %v1026 = vpop.f32.mrf.mxu0
        %v1027 = vadd.f32 %v932, %v1026
        %1028 = vmatmul.f32.gmra.mxu0 %v908
        %v1029 = vpop.f32.mrf.mxu0
        %v1030 = vadd.f32 %v932, %v1029
        %1031 = vmatmul.f32.gmra.mxu0 %v909
        %v1032 = vpop.f32.mrf.mxu0
        %v1033 = vadd.f32 %v932, %v1032
        %1034 = vmatmul.f32.gmra.mxu0 %v910
        %v1035 = vpop.f32.mrf.mxu0
        %v1036 = vadd.f32 %v932, %v1035
        %1037 = vmatmul.f32.gmra.mxu0 %v911
        %v1038 = vpop.f32.mrf.mxu0
        %v1039 = vadd.f32 %v932, %v1038
        %1040 = vmatmul.f32.gmra.mxu0 %v912
        %v1041 = vpop.f32.mrf.mxu0
        %v1042 = vadd.f32 %v932, %v1041
        %1043 = vmatmul.f32.gmra.mxu0 %v913
        %v1044 = vpop.f32.mrf.mxu0
        %v1045 = vadd.f32 %v932, %v1044
        %1046 = vdwg.mxu0
        %v1047 = vmax.f32 %v952, 0.0
        %v1048 = vmax.f32 %v955, 0.0
        %v1049 = vmax.f32 %v958, 0.0
        %v1050 = vmax.f32 %v961, 0.0
        %v1051 = vmax.f32 %v964, 0.0
        %v1052 = vmax.f32 %v967, 0.0
        %v1053 = vmax.f32 %v970, 0.0
        %v1054 = vmax.f32 %v973, 0.0
        %v1055 = vmax.f32 %v976, 0.0
        %v1056 = vmax.f32 %v979, 0.0
        %v1057 = vmax.f32 %v982, 0.0
        %v1058 = vmax.f32 %v985, 0.0
        %v1059 = vmax.f32 %v988, 0.0
        %v1060 = vmax.f32 %v991, 0.0
        %v1061 = vmax.f32 %v994, 0.0
        %v1062 = vmax.f32 %v997, 0.0
        %v1063 = vmax.f32 %v1000, 0.0
        %v1064 = vmax.f32 %v1003, 0.0
        %v1065 = vmax.f32 %v1006, 0.0
        %v1066 = vmax.f32 %v1009, 0.0
        %v1067 = vmax.f32 %v1012, 0.0
        %v1068 = vmax.f32 %v1015, 0.0
        %v1069 = vmax.f32 %v1018, 0.0
        %v1070 = vmax.f32 %v1021, 0.0
        %v1071 = vmax.f32 %v1024, 0.0
        %v1072 = vmax.f32 %v1027, 0.0
        %v1073 = vmax.f32 %v1030, 0.0
        %v1074 = vmax.f32 %v1033, 0.0
        %v1075 = vmax.f32 %v1036, 0.0
        %v1076 = vmax.f32 %v1039, 0.0
        %v1077 = vmax.f32 %v1042, 0.0
        %v1078 = vmax.f32 %v1045, 0.0
        %v1079 = vld [vmem:[%s7] sm:$0x1]
        %v1081 = vperm.slane %v1079, 0
        %v1083 = vmul.f32 %v1047, %v1081
        %v1084 = vmul.f32 %v1048, %v1081
        %v1085 = vmul.f32 %v1049, %v1081
        %v1086 = vmul.f32 %v1050, %v1081
        %v1087 = vmul.f32 %v1051, %v1081
        %v1088 = vmul.f32 %v1052, %v1081
        %v1089 = vmul.f32 %v1053, %v1081
        %v1090 = vmul.f32 %v1054, %v1081
        %v1091 = vmul.f32 %v1055, %v1081
        %v1092 = vmul.f32 %v1056, %v1081
        %v1093 = vmul.f32 %v1057, %v1081
        %v1094 = vmul.f32 %v1058, %v1081
        %v1095 = vmul.f32 %v1059, %v1081
        %v1096 = vmul.f32 %v1060, %v1081
        %v1097 = vmul.f32 %v1061, %v1081
        %v1098 = vmul.f32 %v1062, %v1081
        %v1099 = vmul.f32 %v1063, %v1081
        %v1100 = vmul.f32 %v1064, %v1081
        %v1101 = vmul.f32 %v1065, %v1081
        %v1102 = vmul.f32 %v1066, %v1081
        %v1103 = vmul.f32 %v1067, %v1081
        %v1104 = vmul.f32 %v1068, %v1081
        %v1105 = vmul.f32 %v1069, %v1081
        %v1106 = vmul.f32 %v1070, %v1081
        %v1107 = vmul.f32 %v1071, %v1081
        %v1108 = vmul.f32 %v1072, %v1081
        %v1109 = vmul.f32 %v1073, %v1081
        %v1110 = vmul.f32 %v1074, %v1081
        %v1111 = vmul.f32 %v1075, %v1081
        %v1112 = vmul.f32 %v1076, %v1081
        %v1113 = vmul.f32 %v1077, %v1081
        %v1114 = vmul.f32 %v1078, %v1081
        %1115 = vxpose.xlu0.b32.start [1/16] %v1083, 128
        %1116 = vxpose.xlu0.b32.cont [2/16] %v1084, 128
        %1117 = vxpose.xlu0.b32.cont [3/16] %v1085, 128
        %1118 = vxpose.xlu0.b32.cont [4/16] %v1086, 128
        %1119 = vxpose.xlu0.b32.cont [5/16] %v1087, 128
        %1120 = vxpose.xlu0.b32.cont [6/16] %v1088, 128
        %1121 = vxpose.xlu0.b32.cont [7/16] %v1089, 128
        %1122 = vxpose.xlu0.b32.cont [8/16] %v1090, 128
        %1123 = vxpose.xlu0.b32.cont [9/16] %v1091, 128
        %1124 = vxpose.xlu0.b32.cont [10/16] %v1092, 128
        %1125 = vxpose.xlu0.b32.cont [11/16] %v1093, 128
        %1126 = vxpose.xlu0.b32.cont [12/16] %v1094, 128
        %1127 = vxpose.xlu0.b32.cont [13/16] %v1095, 128
        %1128 = vxpose.xlu0.b32.cont [14/16] %v1096, 128
        %1129 = vxpose.xlu0.b32.cont [15/16] %v1097, 128
        %1130 = vxpose.xlu0.b32.end [16/16] %v1098, 128
        %v1131 = vpop.trf.xlu0
        %v1132 = vpop.trf.xlu0
        %v1133 = vpop.trf.xlu0
        %v1134 = vpop.trf.xlu0
        %v1135 = vpop.trf.xlu0
        %v1136 = vpop.trf.xlu0
        %v1137 = vpop.trf.xlu0
        %v1138 = vpop.trf.xlu0
        %v1139 = vpop.trf.xlu0
        %v1140 = vpop.trf.xlu0
        %v1141 = vpop.trf.xlu0
        %v1142 = vpop.trf.xlu0
        %v1143 = vpop.trf.xlu0
        %v1144 = vpop.trf.xlu0
        %v1145 = vpop.trf.xlu0
        %v1146 = vpop.trf.xlu0
        %1147 = vxpose.xlu0.b32.start [1/16] %v1099, 128
        %1148 = vxpose.xlu0.b32.cont [2/16] %v1100, 128
        %1149 = vxpose.xlu0.b32.cont [3/16] %v1101, 128
        %1150 = vxpose.xlu0.b32.cont [4/16] %v1102, 128
        %1151 = vxpose.xlu0.b32.cont [5/16] %v1103, 128
        %1152 = vxpose.xlu0.b32.cont [6/16] %v1104, 128
        %1153 = vxpose.xlu0.b32.cont [7/16] %v1105, 128
        %1154 = vxpose.xlu0.b32.cont [8/16] %v1106, 128
        %1155 = vxpose.xlu0.b32.cont [9/16] %v1107, 128
        %1156 = vxpose.xlu0.b32.cont [10/16] %v1108, 128
        %1157 = vxpose.xlu0.b32.cont [11/16] %v1109, 128
        %1158 = vxpose.xlu0.b32.cont [12/16] %v1110, 128
        %1159 = vxpose.xlu0.b32.cont [13/16] %v1111, 128
        %1160 = vxpose.xlu0.b32.cont [14/16] %v1112, 128
        %1161 = vxpose.xlu0.b32.cont [15/16] %v1113, 128
        %1162 = vxpose.xlu0.b32.end [16/16] %v1114, 128
        %v1163 = vpop.trf.xlu0
        %v1164 = vpop.trf.xlu0
        %v1165 = vpop.trf.xlu0
        %v1166 = vpop.trf.xlu0
        %v1167 = vpop.trf.xlu0
        %v1168 = vpop.trf.xlu0
        %v1169 = vpop.trf.xlu0
        %v1170 = vpop.trf.xlu0
        %v1171 = vpop.trf.xlu0
        %v1172 = vpop.trf.xlu0
        %v1173 = vpop.trf.xlu0
        %v1174 = vpop.trf.xlu0
        %v1175 = vpop.trf.xlu0
        %v1176 = vpop.trf.xlu0
        %v1177 = vpop.trf.xlu0
        %v1178 = vpop.trf.xlu0
        %v1179 = vadd.f32 %v1131, %v1132
        %v1180 = vadd.f32 %v1179, %v1133
        %v1181 = vadd.f32 %v1180, %v1134
        %v1182 = vadd.f32 %v1181, %v1135
        %v1183 = vadd.f32 %v1182, %v1136
        %v1184 = vadd.f32 %v1183, %v1137
        %v1185 = vadd.f32 %v1184, %v1138
        %v1186 = vadd.f32 %v1185, %v1139
        %v1187 = vadd.f32 %v1186, %v1140
        %v1188 = vadd.f32 %v1187, %v1141
        %v1189 = vadd.f32 %v1188, %v1142
        %v1190 = vadd.f32 %v1189, %v1143
        %v1191 = vadd.f32 %v1190, %v1144
        %v1192 = vadd.f32 %v1191, %v1145
        %v1193 = vadd.f32 %v1192, %v1146
        %v1194 = vrot.slane %v1193, 4
        %v1195 = vadd.f32 %v1193, %v1194
        %v1196 = vrot.slane %v1195, 2
        %v1197 = vadd.f32 %v1195, %v1196
        %v1198 = vrot.slane %v1197, 1
        %v1199 = vadd.f32 %v1197, %v1198
        %v1200 = vadd.f32 %v1163, %v1164
        %v1201 = vadd.f32 %v1200, %v1165
        %v1202 = vadd.f32 %v1201, %v1166
        %v1203 = vadd.f32 %v1202, %v1167
        %v1204 = vadd.f32 %v1203, %v1168
        %v1205 = vadd.f32 %v1204, %v1169
        %v1206 = vadd.f32 %v1205, %v1170
        %v1207 = vadd.f32 %v1206, %v1171
        %v1208 = vadd.f32 %v1207, %v1172
        %v1209 = vadd.f32 %v1208, %v1173
        %v1210 = vadd.f32 %v1209, %v1174
        %v1211 = vadd.f32 %v1210, %v1175
        %v1212 = vadd.f32 %v1211, %v1176
        %v1213 = vadd.f32 %v1212, %v1177
        %v1214 = vadd.f32 %v1213, %v1178
        %v1215 = vrot.slane %v1214, 4
        %v1216 = vadd.f32 %v1214, %v1215
        %v1217 = vrot.slane %v1216, 2
        %v1218 = vadd.f32 %v1216, %v1217
        %v1219 = vrot.slane %v1218, 1
        %v1220 = vadd.f32 %v1218, %v1219
        %v1221 = vld [vmem:[#allocation2] sm:$0x1]
        %1223 = vset.pattern.permute.xlu0 0
        %1224 = vperm.xlu0 %1223, %v1221
        %v1225 = vpop.permute.xlu0 %1224
        %v1227 = vperm.slane %v1225, 0
        %v1228 = vadd.f32 %v1199, %v1227
        %v1229 = vadd.f32 %v1220, %v1227
        %v1232 = vrot.slane %v1229, 7
        %vm1233 = vcmask 1040384
        %v1234 = vsel %vm1233, %v1228, %v1232
        %v1236 = vlaneseq
        %vm1237 = vcmp.ge.s32.totalorder %v1236, 0
        %vm1238 = vcmp.lt.s32.totalorder %v1236, 256
        %vm1239 = vmand %vm1237, %vm1238
        %1240 = vst.msk [vmem:[%s344] sm:$0x3] %vm1239, %v1234
        %s1241 = sand.u32 %s232, 1
        %s1242 = scalar_lea.sflag [#allocation4], %s1241
        %s1243 = sand.u32 %s232, 1
        %s1244 = smul.addr %s1243, 2
        %s1245 = scalar_lea.vmem [#allocation3], %s1244
        // Predicated region
        $region57: #{tpu_custom_call.1} parent=55 // pred_check
          %p1246 = pneg %p242
        $region58: #{tpu_custom_call.1} parent=55 // pred_check_branch
          %1248 = sbr.rel (%p1246) target = $region60
        $region59: #{tpu_custom_call.1} parent=55 // pred_region
          %s1249 = smul.u32 2, %s25
          %1251 = vsyncadd %s1242, 0
          %s1252 = scalar_lea.hbm %s9, %s1249
          %s1254 = sshll.u32 %s1245, 4
          %s1255 = int_to_ptr.vmem [resolvable:$true] %s1254
          %s1256 = sshll.u32 %s1252, 4
          %s1257 = int_to_ptr.hbm [resolvable:$true] %s1256
          %1259 = dma.vmem_to_hbm [thread:$0]  %s1255, 32, %s1257, %s1242
        $region60: #{tpu_custom_call.1} parent=55 // pred_fallthru
          _
      $region56: #{tpu_custom_call.1} parent=5 // pred_fallthru
        _
      %p1260 = scmp.le.s32.totalorder 2, %s20
      // Predicated region
      $region61: #{tpu_custom_call.1} parent=5 // pred_check
        %p1261 = pneg %p1260
      $region62: #{tpu_custom_call.1} parent=5 // pred_check_branch
        %1263 = sbr.rel (%p1261) target = $region64
      $region63: #{tpu_custom_call.1} parent=5 // pred_region
        %s1264 = ssub.s32 %s20, 2
        // Predicated region
        $region65: #{tpu_custom_call.1} parent=63 // pred_check
          %p1265 = pneg %p248
        $region66: #{tpu_custom_call.1} parent=63 // pred_check_branch
          %1267 = sbr.rel (%p1265) target = $region68
        $region67: #{tpu_custom_call.1} parent=63 // pred_region
          %s1268 = sand.u32 %s233, 1
          %s1269 = scalar_lea.sflag [#allocation4], %s1268
          %s1270 = sand.u32 %s233, 1
          %s1271 = smul.addr %s1270, 2
          %s1272 = scalar_lea.vmem [#allocation3], %s1271
          %1274 = dma.done %s1269, 32
        $region68: #{tpu_custom_call.1} parent=63 // pred_fallthru
          _
      $region64: #{tpu_custom_call.1} parent=5 // pred_fallthru
        _
    $region6: #{tpu_custom_call.1} parent=1 // loop_footer
      %s24 = sadd.s32 1, %s20
    $region7: #{tpu_custom_call.1} parent=1 // loop_footer_branch
      %19 = sbr.rel target = $region3
    $region8: #{tpu_custom_call.1} parent=1 // loop_exit
      _
    %1275 = vsyncpa [#allocation4], 1
    %s1276 = scalar_lea.sflag [#allocation4], 1
    %1277 = vsyncpa %s1276, 1

</llo_original>
